<compile_context>
chip_gen: v6e
topology: v6e:2x2x1
jax: 0.10.0
libtpu: 0.0.40
codegen_flags: <defaults>
</compile_context>

<pallas_src>
import functools

import jax
import jax.numpy as jnp
from jax.experimental import pallas as pl
from jax.experimental.pallas import tpu as pltpu


def _resblock1d_kernel(x_ref, w1_ref, s1_ref, b1_ref, w2_ref, s2_ref, b2_ref,
                       out_ref, hpad_ref, *, apply_relu, residual):
    # x_ref:    (1, L + 2P, Cin)  channels-last, length pre-padded with zeros
    # w1_ref:   (K, Cin, Cmid)    tap-major -> each tap is a ready MXU operand
    # s1/b1:    (1, Cmid)         BatchNorm1d folded to per-channel scale/bias
    # w2_ref:   (K, Cmid, Cout)
    # s2/b2:    (1, Cout)
    # out_ref:  (1, L, Cout)
    # hpad_ref: VMEM scratch (L + 2P, Cmid) f32 -- zero-padded conv2 input
    K = w1_ref.shape[0]
    P = K // 2
    L = out_ref.shape[1]
    Cmid = w1_ref.shape[2]
    Cout = out_ref.shape[2]

    # ---- conv1: sum of K shifted matmuls on the MXU ----
    acc1 = jnp.zeros((L, Cmid), jnp.float32)
    for k in range(K):  # K is a small static int
        acc1 = acc1 + jnp.dot(
            x_ref[0, k:k + L, :].astype(jnp.float32),
            w1_ref[k].astype(jnp.float32),
            preferred_element_type=jnp.float32)
    h = acc1 * s1_ref[...] + b1_ref[...]          # folded BatchNorm1d (inference)
    if apply_relu:
        h = jnp.maximum(h, 0.0)

    # ---- zero-padded conv2 input in VMEM scratch; each region written exactly once ----
    if P > 0:
        hpad_ref[:P, :] = jnp.zeros((P, Cmid), jnp.float32)
        hpad_ref[P + L:, :] = jnp.zeros((P, Cmid), jnp.float32)
    hpad_ref[P:P + L, :] = h

    # ---- conv2 ----
    acc2 = jnp.zeros((L, Cout), jnp.float32)
    for k in range(K):
        acc2 = acc2 + jnp.dot(
            hpad_ref[k:k + L, :],
            w2_ref[k].astype(jnp.float32),
            preferred_element_type=jnp.float32)
    y = acc2 * s2_ref[...] + b2_ref[...]          # folded BatchNorm1d (inference)
    # Dropout: inference-mode identity (module default dropout=0.0).

    # ---- identity residual + final activation, single output store ----
    if residual:
        y = y + x_ref[0, P:P + L, :].astype(jnp.float32)
    if apply_relu:
        y = jnp.maximum(y, 0.0)
    out_ref[0] = y.astype(out_ref.dtype)


def res_block1d_forward(x, params, *, kernel=3, stride=1, downsample=None,
                        activation="relu", norm=True, residual=True, eps=1e-5):
    """Pallas TPU equivalent of ResBlock1d.forward (inference mode).

    x: (B, Cin, L)  -- PyTorch Conv1d layout.
    Returns (out, residual) just like the module.
    """
    if isinstance(x, tuple):
        x = x[0]
    if stride != 1 or downsample is not None:
        # TODO(synk): strided conv1 + downsample residual branch not implemented.
        raise NotImplementedError("only stride=1, downsample=None is supported")

    B, Cin, L = x.shape
    w1 = params["w1"]                      # (Cmid, Cin, K)  torch layout
    w2 = params["w2"]                      # (Cout, Cmid, K)
    Cmid, _, K = w1.shape
    Cout = w2.shape[0]
    assert K == kernel
    P = K // 2
    if residual and Cin != Cout:
        raise ValueError("identity residual requires Cin == Cout")

    # Fold BatchNorm (running stats) -- or conv bias when norm=False -- into scale/bias.
    def fold(prefix, c):
        if norm:
            g, b = params[f"{prefix}_gamma"], params[f"{prefix}_beta"]
            m, v = params[f"{prefix}_mean"], params[f"{prefix}_var"]
            s = g / jnp.sqrt(v + eps)
            return s, b - m * s
        return jnp.ones((c,), jnp.float32), params[f"{prefix}_bias"]

    s1, b1 = fold("bn1", Cmid)
    s2, b2 = fold("bn2", Cout)

    # Wrapper-side layout plumbing (fused by XLA): channels-last, length pre-padded,
    # tap-major weights.
    x_cl = jnp.transpose(x, (0, 2, 1))                           # (B, L, Cin)
    x_pad = jnp.pad(x_cl, ((0, 0), (P, P), (0, 0)))              # (B, L+2P, Cin)
    w1_t = jnp.transpose(w1, (2, 1, 0)).astype(jnp.float32)      # (K, Cin, Cmid)
    w2_t = jnp.transpose(w2, (2, 1, 0)).astype(jnp.float32)      # (K, Cmid, Cout)
    s1 = s1.reshape(1, Cmid).astype(jnp.float32)
    b1 = b1.reshape(1, Cmid).astype(jnp.float32)
    s2 = s2.reshape(1, Cout).astype(jnp.float32)
    b2 = b2.reshape(1, Cout).astype(jnp.float32)

    Lp = L + 2 * P
    kfn = functools.partial(_resblock1d_kernel,
                            apply_relu=(activation == "relu"),
                            residual=residual)

    out_cl = pl.pallas_call(
        kfn,
        out_shape=jax.ShapeDtypeStruct((B, L, Cout), x.dtype),
        grid_spec=pltpu.PrefetchScalarGridSpec(
            num_scalar_prefetch=0,
            grid=(B,),
            in_specs=[
                pl.BlockSpec((1, Lp, Cin), lambda b: (b, 0, 0)),
                pl.BlockSpec((K, Cin, Cmid), lambda b: (0, 0, 0)),
                pl.BlockSpec((1, Cmid), lambda b: (0, 0)),
                pl.BlockSpec((1, Cmid), lambda b: (0, 0)),
                pl.BlockSpec((K, Cmid, Cout), lambda b: (0, 0, 0)),
                pl.BlockSpec((1, Cout), lambda b: (0, 0)),
                pl.BlockSpec((1, Cout), lambda b: (0, 0)),
            ],
            out_specs=pl.BlockSpec((1, L, Cout), lambda b: (b, 0, 0)),
            scratch_shapes=[pltpu.VMEM((Lp, Cmid), jnp.float32)],
        ),
        compiler_params=pltpu.CompilerParams(
            dimension_semantics=("parallel",)),
    )(x_pad, w1_t, s1, b1, w2_t, s2, b2)

    out = jnp.transpose(out_cl, (0, 2, 1))                       # back to (B, Cout, L)
    residual_out = x                                             # downsample is None
    return out, residual_out


# ---------------- pure-JAX reference (for correctness check) ----------------
def _ref_forward(x, params, eps=1e-5):
    def conv1d(inp, w):
        p = w.shape[2] // 2
        return jax.lax.conv_general_dilated(
            inp, w, window_strides=(1,), padding=[(p, p)],
            dimension_numbers=("NCH", "OIH", "NCH"))

    def bn(inp, prefix):
        g = params[f"{prefix}_gamma"][None, :, None]
        b = params[f"{prefix}_beta"][None, :, None]
        m = params[f"{prefix}_mean"][None, :, None]
        v = params[f"{prefix}_var"][None, :, None]
        return (inp - m) / jnp.sqrt(v + eps) * g + b

    h = jnp.maximum(bn(conv1d(x, params["w1"]), "bn1"), 0.0)
    y = bn(conv1d(h, params["w2"]), "bn2")
    y = jnp.maximum(y + x, 0.0)
    return y, x


if __name__ == "__main__":
    key = jax.random.PRNGKey(0)
    B, C, L, K = 2, 16, 32, 3
    keys = jax.random.split(key, 11)
    x = jax.random.normal(keys[0], (B, C, L), dtype=jnp.float32)
    params = {
        "w1": jax.random.normal(keys[1], (C, C, K), jnp.float32) * 0.2,
        "bn1_gamma": 1.0 + 0.1 * jax.random.normal(keys[2], (C,), jnp.float32),
        "bn1_beta": 0.1 * jax.random.normal(keys[3], (C,), jnp.float32),
        "bn1_mean": 0.1 * jax.random.normal(keys[4], (C,), jnp.float32),
        "bn1_var": jax.random.uniform(keys[5], (C,), jnp.float32, 0.5, 1.5),
        "w2": jax.random.normal(keys[6], (C, C, K), jnp.float32) * 0.2,
        "bn2_gamma": 1.0 + 0.1 * jax.random.normal(keys[7], (C,), jnp.float32),
        "bn2_beta": 0.1 * jax.random.normal(keys[8], (C,), jnp.float32),
        "bn2_mean": 0.1 * jax.random.normal(keys[9], (C,), jnp.float32),
        "bn2_var": jax.random.uniform(keys[10], (C,), jnp.float32, 0.5, 1.5),
    }

    out, res = res_block1d_forward(x, params, kernel=K)
    out = jax.block_until_ready(out)

    ref_out, ref_res = _ref_forward(x, params)
    assert out.shape == (B, C, L)
    err = float(jnp.max(jnp.abs(out - ref_out)))
    assert jnp.allclose(out, ref_out, atol=1e-4, rtol=1e-4), f"max abs err {err}"
    assert jnp.allclose(res, ref_res)

    print("KERNEL_OK")
</pallas_src>

<mosaic_0001>
module attributes {stable_mosaic.version = 11 : i64} {
  func.func @_resblock1d_kernel(%arg0: i32, %arg1: memref<1x34x16xf32, #tpu.memory_space<vmem>>, %arg2: memref<3x16x16xf32, #tpu.memory_space<vmem>>, %arg3: memref<1x16xf32, #tpu.memory_space<vmem>>, %arg4: memref<1x16xf32, #tpu.memory_space<vmem>>, %arg5: memref<3x16x16xf32, #tpu.memory_space<vmem>>, %arg6: memref<1x16xf32, #tpu.memory_space<vmem>>, %arg7: memref<1x16xf32, #tpu.memory_space<vmem>>, %arg8: memref<1x32x16xf32, #tpu.memory_space<vmem>>, %arg9: memref<34x16xf32, #tpu.memory_space<vmem>>) attributes {dimension_semantics = [#tpu.dimension_semantics<parallel>], iteration_bounds = array<i64: 2>, scalar_prefetch = 0 : i64, scratch_operands = 1 : i64, tpu.core_type = #tpu.core_type<tc>, window_params = [{transform_indices = @transform_0, window_bounds = array<i64: 1, 34, 16>}, {pipeline_mode = #tpu.pipeline_mode<synchronous>, transform_indices = @transform_1, window_bounds = array<i64: 3, 16, 16>}, {pipeline_mode = #tpu.pipeline_mode<synchronous>, transform_indices = @transform_2, window_bounds = array<i64: 1, 16>}, {pipeline_mode = #tpu.pipeline_mode<synchronous>, transform_indices = @transform_3, window_bounds = array<i64: 1, 16>}, {pipeline_mode = #tpu.pipeline_mode<synchronous>, transform_indices = @transform_4, window_bounds = array<i64: 3, 16, 16>}, {pipeline_mode = #tpu.pipeline_mode<synchronous>, transform_indices = @transform_5, window_bounds = array<i64: 1, 16>}, {pipeline_mode = #tpu.pipeline_mode<synchronous>, transform_indices = @transform_6, window_bounds = array<i64: 1, 16>}, {transform_indices = @transform_7, window_bounds = array<i64: 1, 32, 16>}]} {
    %cst = arith.constant 0.000000e+00 : f32
    %0 = vector.broadcast %cst : f32 to vector<32x16xf32>
    %c0 = arith.constant 0 : index
    %c0_0 = arith.constant 0 : index
    %c0_1 = arith.constant 0 : index
    %1 = vector.load %arg1[%c0, %c0_0, %c0_1] : memref<1x34x16xf32, #tpu.memory_space<vmem>>, vector<1x32x16xf32>
    %2 = vector.shape_cast %1 : vector<1x32x16xf32> to vector<32x16xf32>
    %c0_2 = arith.constant 0 : index
    %c0_3 = arith.constant 0 : index
    %c0_4 = arith.constant 0 : index
    %3 = vector.load %arg2[%c0_2, %c0_3, %c0_4] : memref<3x16x16xf32, #tpu.memory_space<vmem>>, vector<1x16x16xf32>
    %4 = vector.shape_cast %3 : vector<1x16x16xf32> to vector<16x16xf32>
    %cst_5 = arith.constant dense<0.000000e+00> : vector<32x16xf32>
    %5 = tpu.matmul %2, %4, %cst_5 {dimension_numbers = #tpu.dot_dimension_numbers<[1], [0], [0], [1], [0, 0, 1, 1], [], []>} : vector<32x16xf32>, vector<16x16xf32>, vector<32x16xf32> -> vector<32x16xf32>
    %6 = arith.addf %0, %5 : vector<32x16xf32>
    %c0_6 = arith.constant 0 : index
    %c1 = arith.constant 1 : index
    %c0_7 = arith.constant 0 : index
    %7 = vector.load %arg1[%c0_6, %c1, %c0_7] : memref<1x34x16xf32, #tpu.memory_space<vmem>>, vector<1x32x16xf32>
    %8 = vector.shape_cast %7 : vector<1x32x16xf32> to vector<32x16xf32>
    %c1_8 = arith.constant 1 : index
    %c0_9 = arith.constant 0 : index
    %c0_10 = arith.constant 0 : index
    %9 = vector.load %arg2[%c1_8, %c0_9, %c0_10] : memref<3x16x16xf32, #tpu.memory_space<vmem>>, vector<1x16x16xf32>
    %10 = vector.shape_cast %9 : vector<1x16x16xf32> to vector<16x16xf32>
    %cst_11 = arith.constant dense<0.000000e+00> : vector<32x16xf32>
    %11 = tpu.matmul %8, %10, %cst_11 {dimension_numbers = #tpu.dot_dimension_numbers<[1], [0], [0], [1], [0, 0, 1, 1], [], []>} : vector<32x16xf32>, vector<16x16xf32>, vector<32x16xf32> -> vector<32x16xf32>
    %12 = arith.addf %6, %11 : vector<32x16xf32>
    %c0_12 = arith.constant 0 : index
    %c2 = arith.constant 2 : index
    %c0_13 = arith.constant 0 : index
    %13 = vector.load %arg1[%c0_12, %c2, %c0_13] : memref<1x34x16xf32, #tpu.memory_space<vmem>>, vector<1x32x16xf32>
    %14 = vector.shape_cast %13 : vector<1x32x16xf32> to vector<32x16xf32>
    %c2_14 = arith.constant 2 : index
    %c0_15 = arith.constant 0 : index
    %c0_16 = arith.constant 0 : index
    %15 = vector.load %arg2[%c2_14, %c0_15, %c0_16] : memref<3x16x16xf32, #tpu.memory_space<vmem>>, vector<1x16x16xf32>
    %16 = vector.shape_cast %15 : vector<1x16x16xf32> to vector<16x16xf32>
    %cst_17 = arith.constant dense<0.000000e+00> : vector<32x16xf32>
    %17 = tpu.matmul %14, %16, %cst_17 {dimension_numbers = #tpu.dot_dimension_numbers<[1], [0], [0], [1], [0, 0, 1, 1], [], []>} : vector<32x16xf32>, vector<16x16xf32>, vector<32x16xf32> -> vector<32x16xf32>
    %18 = arith.addf %12, %17 : vector<32x16xf32>
    %c0_18 = arith.constant 0 : index
    %c0_19 = arith.constant 0 : index
    %19 = vector.load %arg3[%c0_18, %c0_19] : memref<1x16xf32, #tpu.memory_space<vmem>>, vector<1x16xf32>
    %20 = vector.broadcast %19 : vector<1x16xf32> to vector<32x16xf32>
    %21 = arith.mulf %18, %20 : vector<32x16xf32>
    %c0_20 = arith.constant 0 : index
    %c0_21 = arith.constant 0 : index
    %22 = vector.load %arg4[%c0_20, %c0_21] : memref<1x16xf32, #tpu.memory_space<vmem>>, vector<1x16xf32>
    %23 = vector.broadcast %22 : vector<1x16xf32> to vector<32x16xf32>
    %24 = arith.addf %21, %23 : vector<32x16xf32>
    %cst_22 = arith.constant 0.000000e+00 : f32
    %25 = vector.broadcast %cst_22 : f32 to vector<32x16xf32>
    %26 = arith.maximumf %24, %25 : vector<32x16xf32>
    %cst_23 = arith.constant 0.000000e+00 : f32
    %27 = vector.broadcast %cst_23 : f32 to vector<1x16xf32>
    %c0_24 = arith.constant 0 : index
    %c0_25 = arith.constant 0 : index
    %28 = vector.load %arg9[%c0_24, %c0_25] : memref<34x16xf32, #tpu.memory_space<vmem>>, vector<1x16xf32>
    tpu.vector_store %arg9[%c0_24, %c0_25], %27 {strides = array<i32>} : memref<34x16xf32, #tpu.memory_space<vmem>>, vector<1x16xf32>,
    %cst_26 = arith.constant 0.000000e+00 : f32
    %29 = vector.broadcast %cst_26 : f32 to vector<1x16xf32>
    %c33 = arith.constant 33 : index
    %c0_27 = arith.constant 0 : index
    %30 = vector.load %arg9[%c33, %c0_27] : memref<34x16xf32, #tpu.memory_space<vmem>>, vector<1x16xf32>
    tpu.vector_store %arg9[%c33, %c0_27], %29 {strides = array<i32>} : memref<34x16xf32, #tpu.memory_space<vmem>>, vector<1x16xf32>,
    %c1_28 = arith.constant 1 : index
    %c0_29 = arith.constant 0 : index
    %31 = vector.load %arg9[%c1_28, %c0_29] : memref<34x16xf32, #tpu.memory_space<vmem>>, vector<32x16xf32>
    tpu.vector_store %arg9[%c1_28, %c0_29], %26 {strides = array<i32>} : memref<34x16xf32, #tpu.memory_space<vmem>>, vector<32x16xf32>,
    %cst_30 = arith.constant 0.000000e+00 : f32
    %32 = vector.broadcast %cst_30 : f32 to vector<32x16xf32>
    %c0_31 = arith.constant 0 : index
    %c0_32 = arith.constant 0 : index
    %33 = vector.load %arg9[%c0_31, %c0_32] : memref<34x16xf32, #tpu.memory_space<vmem>>, vector<32x16xf32>
    %c0_33 = arith.constant 0 : index
    %c0_34 = arith.constant 0 : index
    %c0_35 = arith.constant 0 : index
    %34 = vector.load %arg5[%c0_33, %c0_34, %c0_35] : memref<3x16x16xf32, #tpu.memory_space<vmem>>, vector<1x16x16xf32>
    %35 = vector.shape_cast %34 : vector<1x16x16xf32> to vector<16x16xf32>
    %cst_36 = arith.constant dense<0.000000e+00> : vector<32x16xf32>
    %36 = tpu.matmul %33, %35, %cst_36 {dimension_numbers = #tpu.dot_dimension_numbers<[1], [0], [0], [1], [0, 0, 1, 1], [], []>} : vector<32x16xf32>, vector<16x16xf32>, vector<32x16xf32> -> vector<32x16xf32>
    %37 = arith.addf %32, %36 : vector<32x16xf32>
    %c1_37 = arith.constant 1 : index
    %c0_38 = arith.constant 0 : index
    %38 = vector.load %arg9[%c1_37, %c0_38] : memref<34x16xf32, #tpu.memory_space<vmem>>, vector<32x16xf32>
    %c1_39 = arith.constant 1 : index
    %c0_40 = arith.constant 0 : index
    %c0_41 = arith.constant 0 : index
    %39 = vector.load %arg5[%c1_39, %c0_40, %c0_41] : memref<3x16x16xf32, #tpu.memory_space<vmem>>, vector<1x16x16xf32>
    %40 = vector.shape_cast %39 : vector<1x16x16xf32> to vector<16x16xf32>
    %cst_42 = arith.constant dense<0.000000e+00> : vector<32x16xf32>
    %41 = tpu.matmul %38, %40, %cst_42 {dimension_numbers = #tpu.dot_dimension_numbers<[1], [0], [0], [1], [0, 0, 1, 1], [], []>} : vector<32x16xf32>, vector<16x16xf32>, vector<32x16xf32> -> vector<32x16xf32>
    %42 = arith.addf %37, %41 : vector<32x16xf32>
    %c2_43 = arith.constant 2 : index
    %c0_44 = arith.constant 0 : index
    %43 = vector.load %arg9[%c2_43, %c0_44] : memref<34x16xf32, #tpu.memory_space<vmem>>, vector<32x16xf32>
    %c2_45 = arith.constant 2 : index
    %c0_46 = arith.constant 0 : index
    %c0_47 = arith.constant 0 : index
    %44 = vector.load %arg5[%c2_45, %c0_46, %c0_47] : memref<3x16x16xf32, #tpu.memory_space<vmem>>, vector<1x16x16xf32>
    %45 = vector.shape_cast %44 : vector<1x16x16xf32> to vector<16x16xf32>
    %cst_48 = arith.constant dense<0.000000e+00> : vector<32x16xf32>
    %46 = tpu.matmul %43, %45, %cst_48 {dimension_numbers = #tpu.dot_dimension_numbers<[1], [0], [0], [1], [0, 0, 1, 1], [], []>} : vector<32x16xf32>, vector<16x16xf32>, vector<32x16xf32> -> vector<32x16xf32>
    %47 = arith.addf %42, %46 : vector<32x16xf32>
    %c0_49 = arith.constant 0 : index
    %c0_50 = arith.constant 0 : index
    %48 = vector.load %arg6[%c0_49, %c0_50] : memref<1x16xf32, #tpu.memory_space<vmem>>, vector<1x16xf32>
    %49 = vector.broadcast %48 : vector<1x16xf32> to vector<32x16xf32>
    %50 = arith.mulf %47, %49 : vector<32x16xf32>
    %c0_51 = arith.constant 0 : index
    %c0_52 = arith.constant 0 : index
    %51 = vector.load %arg7[%c0_51, %c0_52] : memref<1x16xf32, #tpu.memory_space<vmem>>, vector<1x16xf32>
    %52 = vector.broadcast %51 : vector<1x16xf32> to vector<32x16xf32>
    %53 = arith.addf %50, %52 : vector<32x16xf32>
    %c0_53 = arith.constant 0 : index
    %c1_54 = arith.constant 1 : index
    %c0_55 = arith.constant 0 : index
    %54 = vector.load %arg1[%c0_53, %c1_54, %c0_55] : memref<1x34x16xf32, #tpu.memory_space<vmem>>, vector<1x32x16xf32>
    %55 = vector.shape_cast %54 : vector<1x32x16xf32> to vector<32x16xf32>
    %56 = arith.addf %53, %55 : vector<32x16xf32>
    %cst_56 = arith.constant 0.000000e+00 : f32
    %57 = vector.broadcast %cst_56 : f32 to vector<32x16xf32>
    %58 = arith.maximumf %56, %57 : vector<32x16xf32>
    %c0_57 = arith.constant 0 : index
    %c0_58 = arith.constant 0 : index
    %c0_59 = arith.constant 0 : index
    %59 = vector.load %arg8[%c0_57, %c0_58, %c0_59] : memref<1x32x16xf32, #tpu.memory_space<vmem>>, vector<1x32x16xf32>
    %60 = vector.shape_cast %59 : vector<1x32x16xf32> to vector<32x16xf32>
    %61 = vector.shape_cast %58 : vector<32x16xf32> to vector<1x32x16xf32>
    tpu.vector_store %arg8[%c0_57, %c0_58, %c0_59], %61 {strides = array<i32>} : memref<1x32x16xf32, #tpu.memory_space<vmem>>, vector<1x32x16xf32>,
    return
  }
  func.func @transform_0(%arg0: i32) -> (i32, i32, i32) {
    %c0_i32 = arith.constant 0 : i32
    %c0_i32_0 = arith.constant 0 : i32
    %c0_i32_1 = arith.constant 0 : i32
    return %arg0, %c0_i32, %c0_i32_0 : i32, i32, i32
  }
  func.func @transform_1(%arg0: i32) -> (i32, i32, i32) {
    %c0_i32 = arith.constant 0 : i32
    %c0_i32_0 = arith.constant 0 : i32
    %c0_i32_1 = arith.constant 0 : i32
    %c0_i32_2 = arith.constant 0 : i32
    return %c0_i32, %c0_i32_0, %c0_i32_1 : i32, i32, i32
  }
  func.func @transform_2(%arg0: i32) -> (i32, i32) {
    %c0_i32 = arith.constant 0 : i32
    %c0_i32_0 = arith.constant 0 : i32
    %c0_i32_1 = arith.constant 0 : i32
    return %c0_i32, %c0_i32_0 : i32, i32
  }
  func.func @transform_3(%arg0: i32) -> (i32, i32) {
    %c0_i32 = arith.constant 0 : i32
    %c0_i32_0 = arith.constant 0 : i32
    %c0_i32_1 = arith.constant 0 : i32
    return %c0_i32, %c0_i32_0 : i32, i32
  }
  func.func @transform_4(%arg0: i32) -> (i32, i32, i32) {
    %c0_i32 = arith.constant 0 : i32
    %c0_i32_0 = arith.constant 0 : i32
    %c0_i32_1 = arith.constant 0 : i32
    %c0_i32_2 = arith.constant 0 : i32
    return %c0_i32, %c0_i32_0, %c0_i32_1 : i32, i32, i32
  }
  func.func @transform_5(%arg0: i32) -> (i32, i32) {
    %c0_i32 = arith.constant 0 : i32
    %c0_i32_0 = arith.constant 0 : i32
    %c0_i32_1 = arith.constant 0 : i32
    return %c0_i32, %c0_i32_0 : i32, i32
  }
  func.func @transform_6(%arg0: i32) -> (i32, i32) {
    %c0_i32 = arith.constant 0 : i32
    %c0_i32_0 = arith.constant 0 : i32
    %c0_i32_1 = arith.constant 0 : i32
    return %c0_i32, %c0_i32_0 : i32, i32
  }
  func.func @transform_7(%arg0: i32) -> (i32, i32, i32) {
    %c0_i32 = arith.constant 0 : i32
    %c0_i32_0 = arith.constant 0 : i32
    %c0_i32_1 = arith.constant 0 : i32
    return %arg0, %c0_i32, %c0_i32_0 : i32, i32, i32
  }
}

</mosaic_0001>

<llo_original>
// kernel: tpu_custom_call.1
$region0: #{tpu_custom_call.1}
  #allocation0 [shape = 'u32[]', space=smem, size = 0x4, offset = 0x4, fixed_abs, tag = 'smem constant byte address 0x4 - core index']
  #allocation1 [shape = 'u32[144,128]{1,0:T(1,128)}', space=vmem, size = 0x12000, scoped, tag = 'internal scratch']
  #allocation2 [shape = 'f32[34,16]{1,0:T(8,128)}', space=vmem, size = 0x5000, scoped, tag = 'scratch operand']
  %s0 = inlined_call_operand.vmem [shape: f32[2,34,16], index: 0, kind: input, shape index: {}]
  %s1 = inlined_call_operand.vmem [shape: f32[3,16,16], index: 1, kind: input, shape index: {}]
  %s2 = inlined_call_operand.vmem [shape: f32[1,16], index: 2, kind: input, shape index: {}]
  %s3 = inlined_call_operand.vmem [shape: f32[1,16], index: 3, kind: input, shape index: {}]
  %s4 = inlined_call_operand.vmem [shape: f32[3,16,16], index: 4, kind: input, shape index: {}]
  %s5 = inlined_call_operand.vmem [shape: f32[1,16], index: 5, kind: input, shape index: {}]
  %s6 = inlined_call_operand.vmem [shape: f32[1,16], index: 6, kind: input, shape index: {}]
  %s7 = inlined_call_operand.vmem [shape: f32[2,32,16], index: 7, kind: output, shape index: {}]
  %s8 = sld [smem:[#allocation0]]
  $region61: #{tpu_custom_call.1} parent=0
    _
  %s10 = ssub.s32 1, %s8
  %s11 = scalar_select 0, %s10, %s8
  loop: start=0, step=1, limit=4
  $region2: #{tpu_custom_call.1} parent=0 // loop_pre_header
    _
  $region3: #{tpu_custom_call.1} parent=0 // loop_header
    %s13 = sphi 0, %s17
    %p14 = scmp.ge.s32.totalorder %s13, 4
    %s23 = sphi 0, %s25
    %s26 = sphi 0, %s23
    %s27 = sphi 0, %s26
    %s43 = sphi 0, %s27
    %s47 = sphi 0, %s47
    %s49 = sphi 0, %s47
    %s50 = sphi 0, %s49
    %s64 = sphi 0, %s50
    %s68 = sphi 0, %s68
    %s70 = sphi 0, %s68
    %s71 = sphi 0, %s70
    %s85 = sphi 0, %s71
    %s89 = sphi 0, %s89
    %s91 = sphi 0, %s89
    %s92 = sphi 0, %s91
    %s106 = sphi 0, %s92
    %s110 = sphi 0, %s110
    %s112 = sphi 0, %s110
    %s113 = sphi 0, %s112
    %s127 = sphi 0, %s113
    %s131 = sphi 0, %s131
    %s133 = sphi 0, %s131
    %s134 = sphi 0, %s133
    %s148 = sphi 0, %s134
    %s152 = sphi 0, %s152
    %s154 = sphi 0, %s152
    %s155 = sphi 0, %s154
    %s169 = sphi 0, %s155
    %s175 = sphi 0, %s177
    %s178 = sphi 0, %s175
    %s179 = sphi 0, %s178
    %s195 = sphi 0, %s179
  $region4: #{tpu_custom_call.1} parent=0 // loop_header_branch
    %16 = sbr.rel (%p14) target = $region8
  $region5: #{tpu_custom_call.1} parent=0 // loop_body
    %s18 = ssub.s32 %s13, 1
    %s19 = ssub.s32 %s13, 2
    %s20 = sadd.s32 %s13, 1
    %s21 = ssub.s32 %s13, %s20
    %p22 = scmp.eq.s32.totalorder %s21, 0
    %s24 = sadd.s32 %s23, 1
    %s25 = scalar_select %p22, %s23, %s24
    %p28 = pneg %p22
    %p29 = scmp.eq.s32.totalorder %s13, 1
    %p30 = por %p28, %p29
    %p31 = scmp.ne.s32.totalorder %s23, %s26
    %p32 = scmp.eq.s32.totalorder %s13, 0
    %p33 = por %p31, %p32
    %p34 = scmp.ne.s32.totalorder %s23, %s26
    %p35 = scmp.eq.s32.totalorder %s18, 1
    %p36 = por %p34, %p35
    %p37 = scmp.ne.s32.totalorder %s26, %s27
    %p38 = scmp.eq.s32.totalorder %s18, 0
    %p39 = por %p37, %p38
    %p40 = scmp.ne.s32.totalorder %s26, %s27
    %p41 = scmp.eq.s32.totalorder %s19, 1
    %p42 = por %p40, %p41
    %p44 = scmp.ne.s32.totalorder %s27, %s43
    %p45 = scmp.eq.s32.totalorder %s19, 0
    %p46 = por %p44, %p45
    %s48 = sadd.s32 %s47, 1
    %p51 = scmp.eq.s32.totalorder %s13, 1
    %p52 = scmp.ne.s32.totalorder %s47, %s49
    %p53 = scmp.eq.s32.totalorder %s13, 0
    %p54 = por %p52, %p53
    %p55 = scmp.ne.s32.totalorder %s47, %s49
    %p56 = scmp.eq.s32.totalorder %s18, 1
    %p57 = por %p55, %p56
    %p58 = scmp.ne.s32.totalorder %s49, %s50
    %p59 = scmp.eq.s32.totalorder %s18, 0
    %p60 = por %p58, %p59
    %p61 = scmp.ne.s32.totalorder %s49, %s50
    %p62 = scmp.eq.s32.totalorder %s19, 1
    %p63 = por %p61, %p62
    %p65 = scmp.ne.s32.totalorder %s50, %s64
    %p66 = scmp.eq.s32.totalorder %s19, 0
    %p67 = por %p65, %p66
    %s69 = sadd.s32 %s68, 1
    %p72 = scmp.eq.s32.totalorder %s13, 1
    %p73 = scmp.ne.s32.totalorder %s68, %s70
    %p74 = scmp.eq.s32.totalorder %s13, 0
    %p75 = por %p73, %p74
    %p76 = scmp.ne.s32.totalorder %s68, %s70
    %p77 = scmp.eq.s32.totalorder %s18, 1
    %p78 = por %p76, %p77
    %p79 = scmp.ne.s32.totalorder %s70, %s71
    %p80 = scmp.eq.s32.totalorder %s18, 0
    %p81 = por %p79, %p80
    %p82 = scmp.ne.s32.totalorder %s70, %s71
    %p83 = scmp.eq.s32.totalorder %s19, 1
    %p84 = por %p82, %p83
    %p86 = scmp.ne.s32.totalorder %s71, %s85
    %p87 = scmp.eq.s32.totalorder %s19, 0
    %p88 = por %p86, %p87
    %s90 = sadd.s32 %s89, 1
    %p93 = scmp.eq.s32.totalorder %s13, 1
    %p94 = scmp.ne.s32.totalorder %s89, %s91
    %p95 = scmp.eq.s32.totalorder %s13, 0
    %p96 = por %p94, %p95
    %p97 = scmp.ne.s32.totalorder %s89, %s91
    %p98 = scmp.eq.s32.totalorder %s18, 1
    %p99 = por %p97, %p98
    %p100 = scmp.ne.s32.totalorder %s91, %s92
    %p101 = scmp.eq.s32.totalorder %s18, 0
    %p102 = por %p100, %p101
    %p103 = scmp.ne.s32.totalorder %s91, %s92
    %p104 = scmp.eq.s32.totalorder %s19, 1
    %p105 = por %p103, %p104
    %p107 = scmp.ne.s32.totalorder %s92, %s106
    %p108 = scmp.eq.s32.totalorder %s19, 0
    %p109 = por %p107, %p108
    %s111 = sadd.s32 %s110, 1
    %p114 = scmp.eq.s32.totalorder %s13, 1
    %p115 = scmp.ne.s32.totalorder %s110, %s112
    %p116 = scmp.eq.s32.totalorder %s13, 0
    %p117 = por %p115, %p116
    %p118 = scmp.ne.s32.totalorder %s110, %s112
    %p119 = scmp.eq.s32.totalorder %s18, 1
    %p120 = por %p118, %p119
    %p121 = scmp.ne.s32.totalorder %s112, %s113
    %p122 = scmp.eq.s32.totalorder %s18, 0
    %p123 = por %p121, %p122
    %p124 = scmp.ne.s32.totalorder %s112, %s113
    %p125 = scmp.eq.s32.totalorder %s19, 1
    %p126 = por %p124, %p125
    %p128 = scmp.ne.s32.totalorder %s113, %s127
    %p129 = scmp.eq.s32.totalorder %s19, 0
    %p130 = por %p128, %p129
    %s132 = sadd.s32 %s131, 1
    %p135 = scmp.eq.s32.totalorder %s13, 1
    %p136 = scmp.ne.s32.totalorder %s131, %s133
    %p137 = scmp.eq.s32.totalorder %s13, 0
    %p138 = por %p136, %p137
    %p139 = scmp.ne.s32.totalorder %s131, %s133
    %p140 = scmp.eq.s32.totalorder %s18, 1
    %p141 = por %p139, %p140
    %p142 = scmp.ne.s32.totalorder %s133, %s134
    %p143 = scmp.eq.s32.totalorder %s18, 0
    %p144 = por %p142, %p143
    %p145 = scmp.ne.s32.totalorder %s133, %s134
    %p146 = scmp.eq.s32.totalorder %s19, 1
    %p147 = por %p145, %p146
    %p149 = scmp.ne.s32.totalorder %s134, %s148
    %p150 = scmp.eq.s32.totalorder %s19, 0
    %p151 = por %p149, %p150
    %s153 = sadd.s32 %s152, 1
    %p156 = scmp.eq.s32.totalorder %s13, 1
    %p157 = scmp.ne.s32.totalorder %s152, %s154
    %p158 = scmp.eq.s32.totalorder %s13, 0
    %p159 = por %p157, %p158
    %p160 = scmp.ne.s32.totalorder %s152, %s154
    %p161 = scmp.eq.s32.totalorder %s18, 1
    %p162 = por %p160, %p161
    %p163 = scmp.ne.s32.totalorder %s154, %s155
    %p164 = scmp.eq.s32.totalorder %s18, 0
    %p165 = por %p163, %p164
    %p166 = scmp.ne.s32.totalorder %s154, %s155
    %p167 = scmp.eq.s32.totalorder %s19, 1
    %p168 = por %p166, %p167
    %p170 = scmp.ne.s32.totalorder %s155, %s169
    %p171 = scmp.eq.s32.totalorder %s19, 0
    %p172 = por %p170, %p171
    %s173 = ssub.s32 %s13, %s20
    %p174 = scmp.eq.s32.totalorder %s173, 0
    %s176 = sadd.s32 %s175, 1
    %s177 = scalar_select %p174, %s175, %s176
    %p180 = pneg %p174
    %p181 = scmp.eq.s32.totalorder %s13, 1
    %p182 = por %p180, %p181
    %p183 = scmp.ne.s32.totalorder %s175, %s178
    %p184 = scmp.eq.s32.totalorder %s13, 0
    %p185 = por %p183, %p184
    %p186 = scmp.ne.s32.totalorder %s175, %s178
    %p187 = scmp.eq.s32.totalorder %s18, 1
    %p188 = por %p186, %p187
    %p189 = scmp.ne.s32.totalorder %s178, %s179
    %p190 = scmp.eq.s32.totalorder %s18, 0
    %p191 = por %p189, %p190
    %p192 = scmp.ne.s32.totalorder %s178, %s179
    %p193 = scmp.eq.s32.totalorder %s19, 1
    %p194 = por %p192, %p193
    %p196 = scmp.ne.s32.totalorder %s179, %s195
    %p197 = scmp.eq.s32.totalorder %s19, 0
    %p198 = por %p196, %p197
    %p199 = scmp.le.s32.totalorder 1, %s13
    %p200 = scmp.lt.s32.totalorder %s13, 3
    %p201 = pnand %p199, %p200
    %p202 = pneg %p201
    // Predicated region
    $region9: #{tpu_custom_call.1} parent=5 // pred_check
      _
    $region10: #{tpu_custom_call.1} parent=5 // pred_check_branch
      %204 = sbr.rel (%p201) target = $region12
    $region11: #{tpu_custom_call.1} parent=5 // pred_region
      %s205 = ssub.s32 %s13, 1
      // Predicated region
      $region13: #{tpu_custom_call.1} parent=11 // pred_check
        %p206 = pneg %p60
      $region14: #{tpu_custom_call.1} parent=11 // pred_check_branch
        %208 = sbr.rel (%p206) target = $region16
      $region15: #{tpu_custom_call.1} parent=11 // pred_region
        _
      $region16: #{tpu_custom_call.1} parent=11 // pred_fallthru
        _
      // Predicated region
      $region17: #{tpu_custom_call.1} parent=11 // pred_check
        %p209 = pneg %p81
      $region18: #{tpu_custom_call.1} parent=11 // pred_check_branch
        %211 = sbr.rel (%p209) target = $region20
      $region19: #{tpu_custom_call.1} parent=11 // pred_region
        _
      $region20: #{tpu_custom_call.1} parent=11 // pred_fallthru
        _
      // Predicated region
      $region21: #{tpu_custom_call.1} parent=11 // pred_check
        %p212 = pneg %p102
      $region22: #{tpu_custom_call.1} parent=11 // pred_check_branch
        %214 = sbr.rel (%p212) target = $region24
      $region23: #{tpu_custom_call.1} parent=11 // pred_region
        _
      $region24: #{tpu_custom_call.1} parent=11 // pred_fallthru
        _
      // Predicated region
      $region25: #{tpu_custom_call.1} parent=11 // pred_check
        %p215 = pneg %p123
      $region26: #{tpu_custom_call.1} parent=11 // pred_check_branch
        %217 = sbr.rel (%p215) target = $region28
      $region27: #{tpu_custom_call.1} parent=11 // pred_region
        _
      $region28: #{tpu_custom_call.1} parent=11 // pred_fallthru
        _
      // Predicated region
      $region29: #{tpu_custom_call.1} parent=11 // pred_check
        %p218 = pneg %p144
      $region30: #{tpu_custom_call.1} parent=11 // pred_check_branch
        %220 = sbr.rel (%p218) target = $region32
      $region31: #{tpu_custom_call.1} parent=11 // pred_region
        _
      $region32: #{tpu_custom_call.1} parent=11 // pred_fallthru
        _
      // Predicated region
      $region33: #{tpu_custom_call.1} parent=11 // pred_check
        %p221 = pneg %p165
      $region34: #{tpu_custom_call.1} parent=11 // pred_check_branch
        %223 = sbr.rel (%p221) target = $region36
      $region35: #{tpu_custom_call.1} parent=11 // pred_region
        _
      $region36: #{tpu_custom_call.1} parent=11 // pred_fallthru
        _
    $region12: #{tpu_custom_call.1} parent=5 // pred_fallthru
      _
    %p224 = scmp.lt.s32.totalorder %s13, 2
    // Predicated region
    $region37: #{tpu_custom_call.1} parent=5 // pred_check
      %p225 = pneg %p224
    $region38: #{tpu_custom_call.1} parent=5 // pred_check_branch
      %227 = sbr.rel (%p225) target = $region40
    $region39: #{tpu_custom_call.1} parent=5 // pred_region
      // Predicated region
      $region41: #{tpu_custom_call.1} parent=39 // pred_check
        %p228 = pneg %p33
      $region42: #{tpu_custom_call.1} parent=39 // pred_check_branch
        %230 = sbr.rel (%p228) target = $region44
      $region43: #{tpu_custom_call.1} parent=39 // pred_region
        %p231 = scmp.lt.s32.totalorder %s13, 1
        %s232 = scalar_select %p231, %s13, 1
        %s233 = smul.addr %s232, 5
        %s234 = smul.addr %s233, 8
        %s235 = scalar_lea.vmem %s0, %s234
      $region44: #{tpu_custom_call.1} parent=39 // pred_fallthru
        _
    $region40: #{tpu_custom_call.1} parent=5 // pred_fallthru
      _
    %p236 = scmp.le.s32.totalorder 1, %s13
    %p237 = scmp.lt.s32.totalorder %s13, 3
    %p238 = pnand %p236, %p237
    %p239 = pneg %p238
    // Predicated region
    $region45: #{tpu_custom_call.1} parent=5 // pred_check
      _
    $region46: #{tpu_custom_call.1} parent=5 // pred_check_branch
      %241 = sbr.rel (%p238) target = $region48
    $region47: #{tpu_custom_call.1} parent=5 // pred_region
      %s242 = ssub.s32 %s13, 1
      %p243 = scmp.lt.s32.totalorder %s18, 1
      %s244 = scalar_select %p243, %s18, 1
      %s245 = smul.addr %s244, 5
      %s246 = smul.addr %s245, 8
      %s247 = scalar_lea.vmem %s0, %s246
      %p248 = pneg %p39
      %p249 = pneg %p36
      %p250 = pneg %p60
      %p251 = pneg %p57
      %p252 = pneg %p81
      %p253 = pneg %p78
      %p254 = pneg %p102
      %p255 = pneg %p99
      %p256 = pneg %p123
      %p257 = pneg %p120
      %p258 = pneg %p144
      %p259 = pneg %p141
      %p260 = pneg %p165
      %p261 = pneg %p162
      %p262 = pneg %p191
      %p263 = pneg %p188
      %p264 = scmp.lt.s32.totalorder %s18, 1
      %s265 = scalar_select %p264, %s18, 1
      %s266 = smul.addr %s265, 4
      %s267 = smul.addr %s266, 8
      %s268 = scalar_lea.vmem %s7, %s267
      %p269 = scmp.lt.s32.totalorder %s18, 1
      %s270 = scalar_select %p269, %s18, 1
      %s271 = smul.addr %s270, 5
      %s272 = smul.addr %s271, 8
      %s273 = scalar_lea.vmem %s0, %s272
      %p274 = scmp.lt.s32.totalorder %s18, 1
      %s275 = scalar_select %p274, %s18, 1
      %s276 = smul.addr %s275, 4
      %s277 = smul.addr %s276, 8
      %s278 = scalar_lea.vmem %s7, %s277
      %v279 = vld [vmem:[%s273] sm:$0xff]
      %v280 = vld [vmem:[%s273 + $0x8] sm:$0xff]
      %v281 = vld [vmem:[%s273 + $0x10] sm:$0xff]
      %v282 = vld [vmem:[%s273 + $0x18] sm:$0xff]
      %v283 = vld [vmem:[%s1] sm:$0xff]
      %v284 = vld [vmem:[%s1 + $0x8] sm:$0xff]
      %v285 = vld [vmem:[%s273 + $0x1] sm:$0xff]
      %v286 = vld [vmem:[%s273 + $0x9] sm:$0xff]
      %v287 = vld [vmem:[%s273 + $0x11] sm:$0xff]
      %v288 = vld [vmem:[%s273 + $0x19] sm:$0xff]
      %s289 = scalar_lea.vmem %s1, 16
      %v290 = vld [vmem:[%s289] sm:$0xff]
      %v291 = vld [vmem:[%s289 + $0x8] sm:$0xff]
      %vm292 = vcmask 130048
      %v294 = vsel %vm292, %v285, 0
      %v297 = vsel %vm292, %v286, 0
      %v300 = vsel %vm292, %v287, 0
      %v303 = vsel %vm292, %v288, 0
      %305 = vmatprep.subr.mxu0 0.0
      %306 = vmatpush1.msra.mxu0 0.0
      %307 = vmatprep.subr.mxu0 0.0
      %308 = vmatpush1.msra.mxu0 0.0
      %309 = vmatprep.subr.mxu0 0.0
      %310 = vmatpush1.msra.mxu0 0.0
      %311 = vmatprep.subr.mxu0 0.0
      %312 = vmatpush1.msra.mxu0 0.0
      %313 = vmatprep.subr.mxu0 0.0
      %314 = vmatpush1.msra.mxu0 0.0
      %315 = vmatprep.subr.mxu0 0.0
      %316 = vmatpush1.msra.mxu0 0.0
      %317 = vmatprep.subr.mxu0 0.0
      %318 = vmatpush1.msra.mxu0 0.0
      %319 = vmatprep.subr.mxu0 0.0
      %320 = vmatpush1.msra.mxu0 0.0
      %321 = vmatprep.subr.mxu0 0.0
      %322 = vmatpush1.msra.mxu0 0.0
      %323 = vmatprep.subr.mxu0 0.0
      %324 = vmatpush1.msra.mxu0 0.0
      %325 = vmatprep.subr.mxu0 0.0
      %326 = vmatpush1.msra.mxu0 0.0
      %327 = vmatprep.subr.mxu0 0.0
      %328 = vmatpush1.msra.mxu0 0.0
      %329 = vmatprep.subr.mxu0 0.0
      %330 = vmatpush1.msra.mxu0 0.0
      %331 = vmatprep.subr.mxu0 0.0
      %332 = vmatpush1.msra.mxu0 0.0
      %333 = vmatprep.subr.mxu0 0.0
      %334 = vmatpush1.msra.mxu0 %v291
      %335 = vmatprep.subr.mxu0 0.0
      %336 = vmatpush1.msra.mxu0 %v290
      %337 = vmatprep.subr.mxu0 0.0
      %338 = vmatpush2.msra.mxu0 0.0
      %339 = vmatprep.subr.mxu0 0.0
      %340 = vmatpush2.msra.mxu0 0.0
      %341 = vmatprep.subr.mxu0 0.0
      %342 = vmatpush2.msra.mxu0 0.0
      %343 = vmatprep.subr.mxu0 0.0
      %344 = vmatpush2.msra.mxu0 0.0
      %345 = vmatprep.subr.mxu0 0.0
      %346 = vmatpush2.msra.mxu0 0.0
      %347 = vmatprep.subr.mxu0 0.0
      %348 = vmatpush2.msra.mxu0 0.0
      %349 = vmatprep.subr.mxu0 0.0
      %350 = vmatpush2.msra.mxu0 0.0
      %351 = vmatprep.subr.mxu0 0.0
      %352 = vmatpush2.msra.mxu0 0.0
      %353 = vmatprep.subr.mxu0 0.0
      %354 = vmatpush2.msra.mxu0 0.0
      %355 = vmatprep.subr.mxu0 0.0
      %356 = vmatpush2.msra.mxu0 0.0
      %357 = vmatprep.subr.mxu0 0.0
      %358 = vmatpush2.msra.mxu0 0.0
      %359 = vmatprep.subr.mxu0 0.0
      %360 = vmatpush2.msra.mxu0 0.0
      %361 = vmatprep.subr.mxu0 0.0
      %362 = vmatpush2.msra.mxu0 0.0
      %363 = vmatprep.subr.mxu0 0.0
      %364 = vmatpush2.msra.mxu0 0.0
      %365 = vmatprep.subr.mxu0 0.0
      %366 = vmatpush2.msra.mxu0 0.0
      %367 = vmatprep.subr.mxu0 0.0
      %368 = vmatpush2.msra.mxu0 0.0
      %369 = vmatprep.mubr.f32.mxu0 0.0
      %370 = vmatmul.mubr.f32.gmra.mxu0 %v294
      %v371 = vpop.f32.mrf.mxu0
      %v372 = vadd.f32 0.0, %v371
      %v373 = vpop.f32.mrf.mxu0
      %374 = vmatprep.mubr.f32.mxu0 0.0
      %375 = vmatmul.mubr.f32.gmra.mxu0 %v297
      %v376 = vpop.f32.mrf.mxu0
      %v377 = vadd.f32 0.0, %v376
      %v378 = vpop.f32.mrf.mxu0
      %379 = vmatprep.mubr.f32.mxu0 0.0
      %380 = vmatmul.mubr.f32.gmra.mxu0 %v300
      %v381 = vpop.f32.mrf.mxu0
      %v382 = vadd.f32 0.0, %v381
      %v383 = vpop.f32.mrf.mxu0
      %384 = vmatprep.mubr.f32.mxu0 0.0
      %385 = vmatmul.mubr.f32.gmra.mxu0 %v303
      %v386 = vpop.f32.mrf.mxu0
      %v387 = vadd.f32 0.0, %v386
      %v388 = vpop.f32.mrf.mxu0
      %389 = vdwg.mxu0
      %v391 = vsel %vm292, %v279, 0
      %v394 = vsel %vm292, %v280, 0
      %v397 = vsel %vm292, %v281, 0
      %v400 = vsel %vm292, %v282, 0
      %402 = vmatprep.subr.mxu0 0.0
      %403 = vmatpush1.msra.mxu0 0.0
      %404 = vmatprep.subr.mxu0 0.0
      %405 = vmatpush1.msra.mxu0 0.0
      %406 = vmatprep.subr.mxu0 0.0
      %407 = vmatpush1.msra.mxu0 0.0
      %408 = vmatprep.subr.mxu0 0.0
      %409 = vmatpush1.msra.mxu0 0.0
      %410 = vmatprep.subr.mxu0 0.0
      %411 = vmatpush1.msra.mxu0 0.0
      %412 = vmatprep.subr.mxu0 0.0
      %413 = vmatpush1.msra.mxu0 0.0
      %414 = vmatprep.subr.mxu0 0.0
      %415 = vmatpush1.msra.mxu0 0.0
      %416 = vmatprep.subr.mxu0 0.0
      %417 = vmatpush1.msra.mxu0 0.0
      %418 = vmatprep.subr.mxu0 0.0
      %419 = vmatpush1.msra.mxu0 0.0
      %420 = vmatprep.subr.mxu0 0.0
      %421 = vmatpush1.msra.mxu0 0.0
      %422 = vmatprep.subr.mxu0 0.0
      %423 = vmatpush1.msra.mxu0 0.0
      %424 = vmatprep.subr.mxu0 0.0
      %425 = vmatpush1.msra.mxu0 0.0
      %426 = vmatprep.subr.mxu0 0.0
      %427 = vmatpush1.msra.mxu0 0.0
      %428 = vmatprep.subr.mxu0 0.0
      %429 = vmatpush1.msra.mxu0 0.0
      %430 = vmatprep.subr.mxu0 0.0
      %431 = vmatpush1.msra.mxu0 %v284
      %432 = vmatprep.subr.mxu0 0.0
      %433 = vmatpush1.msra.mxu0 %v283
      %434 = vmatprep.subr.mxu0 0.0
      %435 = vmatpush2.msra.mxu0 0.0
      %436 = vmatprep.subr.mxu0 0.0
      %437 = vmatpush2.msra.mxu0 0.0
      %438 = vmatprep.subr.mxu0 0.0
      %439 = vmatpush2.msra.mxu0 0.0
      %440 = vmatprep.subr.mxu0 0.0
      %441 = vmatpush2.msra.mxu0 0.0
      %442 = vmatprep.subr.mxu0 0.0
      %443 = vmatpush2.msra.mxu0 0.0
      %444 = vmatprep.subr.mxu0 0.0
      %445 = vmatpush2.msra.mxu0 0.0
      %446 = vmatprep.subr.mxu0 0.0
      %447 = vmatpush2.msra.mxu0 0.0
      %448 = vmatprep.subr.mxu0 0.0
      %449 = vmatpush2.msra.mxu0 0.0
      %450 = vmatprep.subr.mxu0 0.0
      %451 = vmatpush2.msra.mxu0 0.0
      %452 = vmatprep.subr.mxu0 0.0
      %453 = vmatpush2.msra.mxu0 0.0
      %454 = vmatprep.subr.mxu0 0.0
      %455 = vmatpush2.msra.mxu0 0.0
      %456 = vmatprep.subr.mxu0 0.0
      %457 = vmatpush2.msra.mxu0 0.0
      %458 = vmatprep.subr.mxu0 0.0
      %459 = vmatpush2.msra.mxu0 0.0
      %460 = vmatprep.subr.mxu0 0.0
      %461 = vmatpush2.msra.mxu0 0.0
      %462 = vmatprep.subr.mxu0 0.0
      %463 = vmatpush2.msra.mxu0 0.0
      %464 = vmatprep.subr.mxu0 0.0
      %465 = vmatpush2.msra.mxu0 0.0
      %466 = vmatprep.mubr.f32.mxu0 0.0
      %467 = vmatmul.mubr.f32.gmra.mxu0 %v391
      %v468 = vpop.f32.mrf.mxu0
      %v469 = vadd.f32 %v372, %v468
      %v470 = vpop.f32.mrf.mxu0
      %471 = vmatprep.mubr.f32.mxu0 0.0
      %472 = vmatmul.mubr.f32.gmra.mxu0 %v394
      %v473 = vpop.f32.mrf.mxu0
      %v474 = vadd.f32 %v377, %v473
      %v475 = vpop.f32.mrf.mxu0
      %476 = vmatprep.mubr.f32.mxu0 0.0
      %477 = vmatmul.mubr.f32.gmra.mxu0 %v397
      %v478 = vpop.f32.mrf.mxu0
      %v479 = vadd.f32 %v382, %v478
      %v480 = vpop.f32.mrf.mxu0
      %481 = vmatprep.mubr.f32.mxu0 0.0
      %482 = vmatmul.mubr.f32.gmra.mxu0 %v400
      %v483 = vpop.f32.mrf.mxu0
      %v484 = vadd.f32 %v387, %v483
      %v485 = vpop.f32.mrf.mxu0
      %486 = vdwg.mxu0
      %v487 = vld [vmem:[%s273 + $0x2] sm:$0xff]
      %v488 = vld [vmem:[%s273 + $0xa] sm:$0xff]
      %v489 = vld [vmem:[%s273 + $0x12] sm:$0xff]
      %v490 = vld [vmem:[%s273 + $0x1a] sm:$0xff]
      %s491 = scalar_lea.vmem %s1, 32
      %v492 = vld [vmem:[%s491] sm:$0xff]
      %v493 = vld [vmem:[%s491 + $0x8] sm:$0xff]
      %v495 = vsel %vm292, %v487, 0
      %v498 = vsel %vm292, %v488, 0
      %v501 = vsel %vm292, %v489, 0
      %v504 = vsel %vm292, %v490, 0
      %506 = vmatprep.subr.mxu0 0.0
      %507 = vmatpush1.msra.mxu0 0.0
      %508 = vmatprep.subr.mxu0 0.0
      %509 = vmatpush1.msra.mxu0 0.0
      %510 = vmatprep.subr.mxu0 0.0
      %511 = vmatpush1.msra.mxu0 0.0
      %512 = vmatprep.subr.mxu0 0.0
      %513 = vmatpush1.msra.mxu0 0.0
      %514 = vmatprep.subr.mxu0 0.0
      %515 = vmatpush1.msra.mxu0 0.0
      %516 = vmatprep.subr.mxu0 0.0
      %517 = vmatpush1.msra.mxu0 0.0
      %518 = vmatprep.subr.mxu0 0.0
      %519 = vmatpush1.msra.mxu0 0.0
      %520 = vmatprep.subr.mxu0 0.0
      %521 = vmatpush1.msra.mxu0 0.0
      %522 = vmatprep.subr.mxu0 0.0
      %523 = vmatpush1.msra.mxu0 0.0
      %524 = vmatprep.subr.mxu0 0.0
      %525 = vmatpush1.msra.mxu0 0.0
      %526 = vmatprep.subr.mxu0 0.0
      %527 = vmatpush1.msra.mxu0 0.0
      %528 = vmatprep.subr.mxu0 0.0
      %529 = vmatpush1.msra.mxu0 0.0
      %530 = vmatprep.subr.mxu0 0.0
      %531 = vmatpush1.msra.mxu0 0.0
      %532 = vmatprep.subr.mxu0 0.0
      %533 = vmatpush1.msra.mxu0 0.0
      %534 = vmatprep.subr.mxu0 0.0
      %535 = vmatpush1.msra.mxu0 %v493
      %536 = vmatprep.subr.mxu0 0.0
      %537 = vmatpush1.msra.mxu0 %v492
      %538 = vmatprep.subr.mxu0 0.0
      %539 = vmatpush2.msra.mxu0 0.0
      %540 = vmatprep.subr.mxu0 0.0
      %541 = vmatpush2.msra.mxu0 0.0
      %542 = vmatprep.subr.mxu0 0.0
      %543 = vmatpush2.msra.mxu0 0.0
      %544 = vmatprep.subr.mxu0 0.0
      %545 = vmatpush2.msra.mxu0 0.0
      %546 = vmatprep.subr.mxu0 0.0
      %547 = vmatpush2.msra.mxu0 0.0
      %548 = vmatprep.subr.mxu0 0.0
      %549 = vmatpush2.msra.mxu0 0.0
      %550 = vmatprep.subr.mxu0 0.0
      %551 = vmatpush2.msra.mxu0 0.0
      %552 = vmatprep.subr.mxu0 0.0
      %553 = vmatpush2.msra.mxu0 0.0
      %554 = vmatprep.subr.mxu0 0.0
      %555 = vmatpush2.msra.mxu0 0.0
      %556 = vmatprep.subr.mxu0 0.0
      %557 = vmatpush2.msra.mxu0 0.0
      %558 = vmatprep.subr.mxu0 0.0
      %559 = vmatpush2.msra.mxu0 0.0
      %560 = vmatprep.subr.mxu0 0.0
      %561 = vmatpush2.msra.mxu0 0.0
      %562 = vmatprep.subr.mxu0 0.0
      %563 = vmatpush2.msra.mxu0 0.0
      %564 = vmatprep.subr.mxu0 0.0
      %565 = vmatpush2.msra.mxu0 0.0
      %566 = vmatprep.subr.mxu0 0.0
      %567 = vmatpush2.msra.mxu0 0.0
      %568 = vmatprep.subr.mxu0 0.0
      %569 = vmatpush2.msra.mxu0 0.0
      %570 = vmatprep.mubr.f32.mxu0 0.0
      %571 = vmatmul.mubr.f32.gmra.mxu0 %v495
      %v572 = vpop.f32.mrf.mxu0
      %v573 = vadd.f32 0.0, %v572
      %v574 = vpop.f32.mrf.mxu0
      %575 = vmatprep.mubr.f32.mxu0 0.0
      %576 = vmatmul.mubr.f32.gmra.mxu0 %v498
      %v577 = vpop.f32.mrf.mxu0
      %v578 = vadd.f32 0.0, %v577
      %v579 = vpop.f32.mrf.mxu0
      %580 = vmatprep.mubr.f32.mxu0 0.0
      %581 = vmatmul.mubr.f32.gmra.mxu0 %v501
      %v582 = vpop.f32.mrf.mxu0
      %v583 = vadd.f32 0.0, %v582
      %v584 = vpop.f32.mrf.mxu0
      %585 = vmatprep.mubr.f32.mxu0 0.0
      %586 = vmatmul.mubr.f32.gmra.mxu0 %v504
      %v587 = vpop.f32.mrf.mxu0
      %v588 = vadd.f32 0.0, %v587
      %v589 = vpop.f32.mrf.mxu0
      %590 = vdwg.mxu0
      %v591 = vadd.f32 %v469, %v573
      %v592 = vadd.f32 %v474, %v578
      %v593 = vadd.f32 %v479, %v583
      %v594 = vadd.f32 %v484, %v588
      %v595 = vld [vmem:[%s2] sm:$0x1]
      %v597 = vlaneseq
      %v598 = vshrl.u32 %v597, 7
      %v599 = vsub.s32 0, %v598
      %v600 = vrot.slane %v595, %v599
      %v602 = vmul.f32 %v591, %v600
      %v603 = vmul.f32 %v592, %v600
      %v604 = vmul.f32 %v593, %v600
      %v605 = vmul.f32 %v594, %v600
      %v606 = vld [vmem:[%s3] sm:$0x1]
      %v608 = vlaneseq
      %v609 = vshrl.u32 %v608, 7
      %v610 = vsub.s32 0, %v609
      %v611 = vrot.slane %v606, %v610
      %v613 = vadd.f32 %v602, %v611
      %v614 = vadd.f32 %v603, %v611
      %v615 = vadd.f32 %v604, %v611
      %v616 = vadd.f32 %v605, %v611
      %v617 = vmax.f32 %v613, 0.0
      %v618 = vmax.f32 %v614, 0.0
      %v619 = vmax.f32 %v615, 0.0
      %v620 = vmax.f32 %v616, 0.0
      %vm621 = vcmask 122880
      %622 = vst.msk [vmem:[#allocation2] sm:$0x1] %vm621, 0.0
      %623 = vst.msk [vmem:[#allocation2 + $0x21] sm:$0x1] %vm621, 0.0
      %624 = vst.msk [vmem:[#allocation2 + $0x1] sm:$0xff] %vm292, %v617
      %625 = vst.msk [vmem:[#allocation2 + $0x9] sm:$0xff] %vm292, %v618
      %626 = vst.msk [vmem:[#allocation2 + $0x11] sm:$0xff] %vm292, %v619
      %627 = vst.msk [vmem:[#allocation2 + $0x19] sm:$0xff] %vm292, %v620
      %v628 = vld [vmem:[#allocation2] sm:$0xff]
      %v629 = vld [vmem:[#allocation2 + $0x8] sm:$0xff]
      %v630 = vld [vmem:[#allocation2 + $0x10] sm:$0xff]
      %v631 = vld [vmem:[#allocation2 + $0x18] sm:$0xff]
      %v632 = vld [vmem:[%s4] sm:$0xff]
      %v633 = vld [vmem:[%s4 + $0x8] sm:$0xff]
      %v634 = vld [vmem:[#allocation2 + $0x1] sm:$0xff]
      %v635 = vld [vmem:[#allocation2 + $0x9] sm:$0xff]
      %v636 = vld [vmem:[#allocation2 + $0x11] sm:$0xff]
      %v637 = vld [vmem:[#allocation2 + $0x19] sm:$0xff]
      %s638 = scalar_lea.vmem %s4, 16
      %v639 = vld [vmem:[%s638] sm:$0xff]
      %v640 = vld [vmem:[%s638 + $0x8] sm:$0xff]
      %v642 = vsel %vm292, %v634, 0
      %v645 = vsel %vm292, %v635, 0
      %v648 = vsel %vm292, %v636, 0
      %v651 = vsel %vm292, %v637, 0
      %653 = vmatprep.subr.mxu0 0.0
      %654 = vmatpush1.msra.mxu0 0.0
      %655 = vmatprep.subr.mxu0 0.0
      %656 = vmatpush1.msra.mxu0 0.0
      %657 = vmatprep.subr.mxu0 0.0
      %658 = vmatpush1.msra.mxu0 0.0
      %659 = vmatprep.subr.mxu0 0.0
      %660 = vmatpush1.msra.mxu0 0.0
      %661 = vmatprep.subr.mxu0 0.0
      %662 = vmatpush1.msra.mxu0 0.0
      %663 = vmatprep.subr.mxu0 0.0
      %664 = vmatpush1.msra.mxu0 0.0
      %665 = vmatprep.subr.mxu0 0.0
      %666 = vmatpush1.msra.mxu0 0.0
      %667 = vmatprep.subr.mxu0 0.0
      %668 = vmatpush1.msra.mxu0 0.0
      %669 = vmatprep.subr.mxu0 0.0
      %670 = vmatpush1.msra.mxu0 0.0
      %671 = vmatprep.subr.mxu0 0.0
      %672 = vmatpush1.msra.mxu0 0.0
      %673 = vmatprep.subr.mxu0 0.0
      %674 = vmatpush1.msra.mxu0 0.0
      %675 = vmatprep.subr.mxu0 0.0
      %676 = vmatpush1.msra.mxu0 0.0
      %677 = vmatprep.subr.mxu0 0.0
      %678 = vmatpush1.msra.mxu0 0.0
      %679 = vmatprep.subr.mxu0 0.0
      %680 = vmatpush1.msra.mxu0 0.0
      %681 = vmatprep.subr.mxu0 0.0
      %682 = vmatpush1.msra.mxu0 %v640
      %683 = vmatprep.subr.mxu0 0.0
      %684 = vmatpush1.msra.mxu0 %v639
      %685 = vmatprep.subr.mxu0 0.0
      %686 = vmatpush2.msra.mxu0 0.0
      %687 = vmatprep.subr.mxu0 0.0
      %688 = vmatpush2.msra.mxu0 0.0
      %689 = vmatprep.subr.mxu0 0.0
      %690 = vmatpush2.msra.mxu0 0.0
      %691 = vmatprep.subr.mxu0 0.0
      %692 = vmatpush2.msra.mxu0 0.0
      %693 = vmatprep.subr.mxu0 0.0
      %694 = vmatpush2.msra.mxu0 0.0
      %695 = vmatprep.subr.mxu0 0.0
      %696 = vmatpush2.msra.mxu0 0.0
      %697 = vmatprep.subr.mxu0 0.0
      %698 = vmatpush2.msra.mxu0 0.0
      %699 = vmatprep.subr.mxu0 0.0
      %700 = vmatpush2.msra.mxu0 0.0
      %701 = vmatprep.subr.mxu0 0.0
      %702 = vmatpush2.msra.mxu0 0.0
      %703 = vmatprep.subr.mxu0 0.0
      %704 = vmatpush2.msra.mxu0 0.0
      %705 = vmatprep.subr.mxu0 0.0
      %706 = vmatpush2.msra.mxu0 0.0
      %707 = vmatprep.subr.mxu0 0.0
      %708 = vmatpush2.msra.mxu0 0.0
      %709 = vmatprep.subr.mxu0 0.0
      %710 = vmatpush2.msra.mxu0 0.0
      %711 = vmatprep.subr.mxu0 0.0
      %712 = vmatpush2.msra.mxu0 0.0
      %713 = vmatprep.subr.mxu0 0.0
      %714 = vmatpush2.msra.mxu0 0.0
      %715 = vmatprep.subr.mxu0 0.0
      %716 = vmatpush2.msra.mxu0 0.0
      %717 = vmatprep.mubr.f32.mxu0 0.0
      %718 = vmatmul.mubr.f32.gmra.mxu0 %v642
      %v719 = vpop.f32.mrf.mxu0
      %v720 = vadd.f32 0.0, %v719
      %v721 = vpop.f32.mrf.mxu0
      %722 = vmatprep.mubr.f32.mxu0 0.0
      %723 = vmatmul.mubr.f32.gmra.mxu0 %v645
      %v724 = vpop.f32.mrf.mxu0
      %v725 = vadd.f32 0.0, %v724
      %v726 = vpop.f32.mrf.mxu0
      %727 = vmatprep.mubr.f32.mxu0 0.0
      %728 = vmatmul.mubr.f32.gmra.mxu0 %v648
      %v729 = vpop.f32.mrf.mxu0
      %v730 = vadd.f32 0.0, %v729
      %v731 = vpop.f32.mrf.mxu0
      %732 = vmatprep.mubr.f32.mxu0 0.0
      %733 = vmatmul.mubr.f32.gmra.mxu0 %v651
      %v734 = vpop.f32.mrf.mxu0
      %v735 = vadd.f32 0.0, %v734
      %v736 = vpop.f32.mrf.mxu0
      %737 = vdwg.mxu0
      %v739 = vsel %vm292, %v628, 0
      %v742 = vsel %vm292, %v629, 0
      %v745 = vsel %vm292, %v630, 0
      %v748 = vsel %vm292, %v631, 0
      %750 = vmatprep.subr.mxu0 0.0
      %751 = vmatpush1.msra.mxu0 0.0
      %752 = vmatprep.subr.mxu0 0.0
      %753 = vmatpush1.msra.mxu0 0.0
      %754 = vmatprep.subr.mxu0 0.0
      %755 = vmatpush1.msra.mxu0 0.0
      %756 = vmatprep.subr.mxu0 0.0
      %757 = vmatpush1.msra.mxu0 0.0
      %758 = vmatprep.subr.mxu0 0.0
      %759 = vmatpush1.msra.mxu0 0.0
      %760 = vmatprep.subr.mxu0 0.0
      %761 = vmatpush1.msra.mxu0 0.0
      %762 = vmatprep.subr.mxu0 0.0
      %763 = vmatpush1.msra.mxu0 0.0
      %764 = vmatprep.subr.mxu0 0.0
      %765 = vmatpush1.msra.mxu0 0.0
      %766 = vmatprep.subr.mxu0 0.0
      %767 = vmatpush1.msra.mxu0 0.0
      %768 = vmatprep.subr.mxu0 0.0
      %769 = vmatpush1.msra.mxu0 0.0
      %770 = vmatprep.subr.mxu0 0.0
      %771 = vmatpush1.msra.mxu0 0.0
      %772 = vmatprep.subr.mxu0 0.0
      %773 = vmatpush1.msra.mxu0 0.0
      %774 = vmatprep.subr.mxu0 0.0
      %775 = vmatpush1.msra.mxu0 0.0
      %776 = vmatprep.subr.mxu0 0.0
      %777 = vmatpush1.msra.mxu0 0.0
      %778 = vmatprep.subr.mxu0 0.0
      %779 = vmatpush1.msra.mxu0 %v633
      %780 = vmatprep.subr.mxu0 0.0
      %781 = vmatpush1.msra.mxu0 %v632
      %782 = vmatprep.subr.mxu0 0.0
      %783 = vmatpush2.msra.mxu0 0.0
      %784 = vmatprep.subr.mxu0 0.0
      %785 = vmatpush2.msra.mxu0 0.0
      %786 = vmatprep.subr.mxu0 0.0
      %787 = vmatpush2.msra.mxu0 0.0
      %788 = vmatprep.subr.mxu0 0.0
      %789 = vmatpush2.msra.mxu0 0.0
      %790 = vmatprep.subr.mxu0 0.0
      %791 = vmatpush2.msra.mxu0 0.0
      %792 = vmatprep.subr.mxu0 0.0
      %793 = vmatpush2.msra.mxu0 0.0
      %794 = vmatprep.subr.mxu0 0.0
      %795 = vmatpush2.msra.mxu0 0.0
      %796 = vmatprep.subr.mxu0 0.0
      %797 = vmatpush2.msra.mxu0 0.0
      %798 = vmatprep.subr.mxu0 0.0
      %799 = vmatpush2.msra.mxu0 0.0
      %800 = vmatprep.subr.mxu0 0.0
      %801 = vmatpush2.msra.mxu0 0.0
      %802 = vmatprep.subr.mxu0 0.0
      %803 = vmatpush2.msra.mxu0 0.0
      %804 = vmatprep.subr.mxu0 0.0
      %805 = vmatpush2.msra.mxu0 0.0
      %806 = vmatprep.subr.mxu0 0.0
      %807 = vmatpush2.msra.mxu0 0.0
      %808 = vmatprep.subr.mxu0 0.0
      %809 = vmatpush2.msra.mxu0 0.0
      %810 = vmatprep.subr.mxu0 0.0
      %811 = vmatpush2.msra.mxu0 0.0
      %812 = vmatprep.subr.mxu0 0.0
      %813 = vmatpush2.msra.mxu0 0.0
      %814 = vmatprep.mubr.f32.mxu0 0.0
      %815 = vmatmul.mubr.f32.gmra.mxu0 %v739
      %v816 = vpop.f32.mrf.mxu0
      %v817 = vadd.f32 %v720, %v816
      %v818 = vpop.f32.mrf.mxu0
      %819 = vmatprep.mubr.f32.mxu0 0.0
      %820 = vmatmul.mubr.f32.gmra.mxu0 %v742
      %v821 = vpop.f32.mrf.mxu0
      %v822 = vadd.f32 %v725, %v821
      %v823 = vpop.f32.mrf.mxu0
      %824 = vmatprep.mubr.f32.mxu0 0.0
      %825 = vmatmul.mubr.f32.gmra.mxu0 %v745
      %v826 = vpop.f32.mrf.mxu0
      %v827 = vadd.f32 %v730, %v826
      %v828 = vpop.f32.mrf.mxu0
      %829 = vmatprep.mubr.f32.mxu0 0.0
      %830 = vmatmul.mubr.f32.gmra.mxu0 %v748
      %v831 = vpop.f32.mrf.mxu0
      %v832 = vadd.f32 %v735, %v831
      %v833 = vpop.f32.mrf.mxu0
      %834 = vdwg.mxu0
      %v835 = vld [vmem:[#allocation2 + $0x2] sm:$0xff]
      %v836 = vld [vmem:[#allocation2 + $0xa] sm:$0xff]
      %v837 = vld [vmem:[#allocation2 + $0x12] sm:$0xff]
      %v838 = vld [vmem:[#allocation2 + $0x1a] sm:$0xff]
      %s839 = scalar_lea.vmem %s4, 32
      %v840 = vld [vmem:[%s839] sm:$0xff]
      %v841 = vld [vmem:[%s839 + $0x8] sm:$0xff]
      %v843 = vsel %vm292, %v835, 0
      %v846 = vsel %vm292, %v836, 0
      %v849 = vsel %vm292, %v837, 0
      %v852 = vsel %vm292, %v838, 0
      %854 = vmatprep.subr.mxu0 0.0
      %855 = vmatpush1.msra.mxu0 0.0
      %856 = vmatprep.subr.mxu0 0.0
      %857 = vmatpush1.msra.mxu0 0.0
      %858 = vmatprep.subr.mxu0 0.0
      %859 = vmatpush1.msra.mxu0 0.0
      %860 = vmatprep.subr.mxu0 0.0
      %861 = vmatpush1.msra.mxu0 0.0
      %862 = vmatprep.subr.mxu0 0.0
      %863 = vmatpush1.msra.mxu0 0.0
      %864 = vmatprep.subr.mxu0 0.0
      %865 = vmatpush1.msra.mxu0 0.0
      %866 = vmatprep.subr.mxu0 0.0
      %867 = vmatpush1.msra.mxu0 0.0
      %868 = vmatprep.subr.mxu0 0.0
      %869 = vmatpush1.msra.mxu0 0.0
      %870 = vmatprep.subr.mxu0 0.0
      %871 = vmatpush1.msra.mxu0 0.0
      %872 = vmatprep.subr.mxu0 0.0
      %873 = vmatpush1.msra.mxu0 0.0
      %874 = vmatprep.subr.mxu0 0.0
      %875 = vmatpush1.msra.mxu0 0.0
      %876 = vmatprep.subr.mxu0 0.0
      %877 = vmatpush1.msra.mxu0 0.0
      %878 = vmatprep.subr.mxu0 0.0
      %879 = vmatpush1.msra.mxu0 0.0
      %880 = vmatprep.subr.mxu0 0.0
      %881 = vmatpush1.msra.mxu0 0.0
      %882 = vmatprep.subr.mxu0 0.0
      %883 = vmatpush1.msra.mxu0 %v841
      %884 = vmatprep.subr.mxu0 0.0
      %885 = vmatpush1.msra.mxu0 %v840
      %886 = vmatprep.subr.mxu0 0.0
      %887 = vmatpush2.msra.mxu0 0.0
      %888 = vmatprep.subr.mxu0 0.0
      %889 = vmatpush2.msra.mxu0 0.0
      %890 = vmatprep.subr.mxu0 0.0
      %891 = vmatpush2.msra.mxu0 0.0
      %892 = vmatprep.subr.mxu0 0.0
      %893 = vmatpush2.msra.mxu0 0.0
      %894 = vmatprep.subr.mxu0 0.0
      %895 = vmatpush2.msra.mxu0 0.0
      %896 = vmatprep.subr.mxu0 0.0
      %897 = vmatpush2.msra.mxu0 0.0
      %898 = vmatprep.subr.mxu0 0.0
      %899 = vmatpush2.msra.mxu0 0.0
      %900 = vmatprep.subr.mxu0 0.0
      %901 = vmatpush2.msra.mxu0 0.0
      %902 = vmatprep.subr.mxu0 0.0
      %903 = vmatpush2.msra.mxu0 0.0
      %904 = vmatprep.subr.mxu0 0.0
      %905 = vmatpush2.msra.mxu0 0.0
      %906 = vmatprep.subr.mxu0 0.0
      %907 = vmatpush2.msra.mxu0 0.0
      %908 = vmatprep.subr.mxu0 0.0
      %909 = vmatpush2.msra.mxu0 0.0
      %910 = vmatprep.subr.mxu0 0.0
      %911 = vmatpush2.msra.mxu0 0.0
      %912 = vmatprep.subr.mxu0 0.0
      %913 = vmatpush2.msra.mxu0 0.0
      %914 = vmatprep.subr.mxu0 0.0
      %915 = vmatpush2.msra.mxu0 0.0
      %916 = vmatprep.subr.mxu0 0.0
      %917 = vmatpush2.msra.mxu0 0.0
      %918 = vmatprep.mubr.f32.mxu0 0.0
      %919 = vmatmul.mubr.f32.gmra.mxu0 %v843
      %v920 = vpop.f32.mrf.mxu0
      %v921 = vadd.f32 0.0, %v920
      %v922 = vpop.f32.mrf.mxu0
      %923 = vmatprep.mubr.f32.mxu0 0.0
      %924 = vmatmul.mubr.f32.gmra.mxu0 %v846
      %v925 = vpop.f32.mrf.mxu0
      %v926 = vadd.f32 0.0, %v925
      %v927 = vpop.f32.mrf.mxu0
      %928 = vmatprep.mubr.f32.mxu0 0.0
      %929 = vmatmul.mubr.f32.gmra.mxu0 %v849
      %v930 = vpop.f32.mrf.mxu0
      %v931 = vadd.f32 0.0, %v930
      %v932 = vpop.f32.mrf.mxu0
      %933 = vmatprep.mubr.f32.mxu0 0.0
      %934 = vmatmul.mubr.f32.gmra.mxu0 %v852
      %v935 = vpop.f32.mrf.mxu0
      %v936 = vadd.f32 0.0, %v935
      %v937 = vpop.f32.mrf.mxu0
      %938 = vdwg.mxu0
      %v939 = vadd.f32 %v817, %v921
      %v940 = vadd.f32 %v822, %v926
      %v941 = vadd.f32 %v827, %v931
      %v942 = vadd.f32 %v832, %v936
      %v943 = vld [vmem:[%s5] sm:$0x1]
      %v945 = vlaneseq
      %v946 = vshrl.u32 %v945, 7
      %v947 = vsub.s32 0, %v946
      %v948 = vrot.slane %v943, %v947
      %v950 = vmul.f32 %v939, %v948
      %v951 = vmul.f32 %v940, %v948
      %v952 = vmul.f32 %v941, %v948
      %v953 = vmul.f32 %v942, %v948
      %v954 = vld [vmem:[%s6] sm:$0x1]
      %v956 = vlaneseq
      %v957 = vshrl.u32 %v956, 7
      %v958 = vsub.s32 0, %v957
      %v959 = vrot.slane %v954, %v958
      %v961 = vadd.f32 %v950, %v959
      %v962 = vadd.f32 %v951, %v959
      %v963 = vadd.f32 %v952, %v959
      %v964 = vadd.f32 %v953, %v959
      %v965 = vld [vmem:[%s273 + $0x1] sm:$0xff]
      %v966 = vld [vmem:[%s273 + $0x9] sm:$0xff]
      %v967 = vld [vmem:[%s273 + $0x11] sm:$0xff]
      %v968 = vld [vmem:[%s273 + $0x19] sm:$0xff]
      %v969 = vadd.f32 %v961, %v965
      %v970 = vadd.f32 %v962, %v966
      %v971 = vadd.f32 %v963, %v967
      %v972 = vadd.f32 %v964, %v968
      %v973 = vmax.f32 %v969, 0.0
      %v974 = vmax.f32 %v970, 0.0
      %v975 = vmax.f32 %v971, 0.0
      %v976 = vmax.f32 %v972, 0.0
      %977 = vst.msk [vmem:[%s278] sm:$0xff] %vm292, %v973
      %978 = vst.msk [vmem:[%s278 + $0x8] sm:$0xff] %vm292, %v974
      %979 = vst.msk [vmem:[%s278 + $0x10] sm:$0xff] %vm292, %v975
      %980 = vst.msk [vmem:[%s278 + $0x18] sm:$0xff] %vm292, %v976
      %p981 = scmp.lt.s32.totalorder %s18, 1
      %s982 = scalar_select %p981, %s18, 1
      %s983 = smul.addr %s982, 4
      %s984 = smul.addr %s983, 8
      %s985 = scalar_lea.vmem %s7, %s984
      // Predicated region
      $region49: #{tpu_custom_call.1} parent=47 // pred_check
        %p986 = pneg %p188
      $region50: #{tpu_custom_call.1} parent=47 // pred_check_branch
        %988 = sbr.rel (%p986) target = $region52
      $region51: #{tpu_custom_call.1} parent=47 // pred_region
        _
      $region52: #{tpu_custom_call.1} parent=47 // pred_fallthru
        _
    $region48: #{tpu_custom_call.1} parent=5 // pred_fallthru
      _
    %p989 = scmp.le.s32.totalorder 2, %s13
    // Predicated region
    $region53: #{tpu_custom_call.1} parent=5 // pred_check
      %p990 = pneg %p989
    $region54: #{tpu_custom_call.1} parent=5 // pred_check_branch
      %992 = sbr.rel (%p990) target = $region56
    $region55: #{tpu_custom_call.1} parent=5 // pred_region
      %s993 = ssub.s32 %s13, 2
      // Predicated region
      $region57: #{tpu_custom_call.1} parent=55 // pred_check
        %p994 = pneg %p194
      $region58: #{tpu_custom_call.1} parent=55 // pred_check_branch
        %996 = sbr.rel (%p994) target = $region60
      $region59: #{tpu_custom_call.1} parent=55 // pred_region
        %p997 = scmp.lt.s32.totalorder %s19, 1
        %s998 = scalar_select %p997, %s19, 1
        %s999 = smul.addr %s998, 4
        %s1000 = smul.addr %s999, 8
        %s1001 = scalar_lea.vmem %s7, %s1000
      $region60: #{tpu_custom_call.1} parent=55 // pred_fallthru
        _
    $region56: #{tpu_custom_call.1} parent=5 // pred_fallthru
      _
  $region6: #{tpu_custom_call.1} parent=0 // loop_footer
    %s17 = sadd.s32 1, %s13
  $region7: #{tpu_custom_call.1} parent=0 // loop_footer_branch
    %12 = sbr.rel target = $region3
  $region8: #{tpu_custom_call.1} parent=0 // loop_exit
    _

</llo_original>
